<compile_context>
chip_gen: v7x
topology: tpu7x:2x2x1
jax: 0.10.0
libtpu: 0.0.40
codegen_flags: <defaults>
</compile_context>

<pallas_src>
import jax
import jax.numpy as jnp
from jax.experimental import pallas as pl
from jax.experimental.pallas import tpu as pltpu

EPS = 1e-5
NEG_SLOPE = 1.0          # nn.LeakyReLU(1) -> identity; kept for fidelity
TM_CAP = 8192            # upper bound on the M tile; VMEM budget bounds it further


def _round_up(x, m):
    return (x + m - 1) // m * m


def _vmem_budget_bytes():
    """~70% of physical VMEM of the current TPU generation (fallback 64 MiB)."""
    phys = None
    try:
        info = pltpu.get_tpu_info()
        phys = getattr(info, "vmem_capacity_bytes", None)
    except Exception:
        phys = None
    if not phys:
        phys = 64 * 1024 * 1024
    return int(phys * 0.7)


def _pick_tile_m(m, kpad, cpad, conv_bytes, y_bytes, budget):
    """Largest TM (multiple of 16) whose double-buffered tiles fit the VMEM budget."""
    fixed = 2 * kpad * cpad * 2 + 64 * 1024                 # resident W (budget 2 bufs) + slack
    per_tm_p1 = 2 * kpad * 2 + 2 * cpad * conv_bytes        # X dbuf + conv-out dbuf
    per_tm_p2 = 2 * cpad * (conv_bytes + y_bytes)           # conv-in dbuf + y-out dbuf
    per_tm = max(per_tm_p1, per_tm_p2)
    tm = (budget - fixed) // per_tm
    tm = min(int(tm), TM_CAP, _round_up(m, 16))
    tm = (tm // 16) * 16                                    # bf16 sublane packing
    return max(tm, 16)


# ---------------------------------------------------------------------------
# Pass 1: conv-as-matmul (bf16 MXU, f32 acc) + per-tile partial sum / sumsq
# ---------------------------------------------------------------------------
def _conv_stats_kernel(x_ref, w_ref, b_ref, conv_ref, psum_ref, psumsq_ref):
    conv = jnp.dot(x_ref[...], w_ref[...],
                   preferred_element_type=jnp.float32) + b_ref[...]
    conv_ref[...] = conv.astype(conv_ref.dtype)
    # Per-tile partials; padded rows (zero X rows) contribute exactly `bias`,
    # which is subtracted analytically in the wrapper -> no masking here.
    s = jnp.sum(conv, axis=0, keepdims=True)                # (1, Cpad)
    sq = jnp.sum(conv * conv, axis=0, keepdims=True)        # (1, Cpad)
    psum_ref[...] = s[jnp.newaxis]                          # (1, 1, Cpad)
    psumsq_ref[...] = sq[jnp.newaxis]


# ---------------------------------------------------------------------------
# Pass 2: y = conv * scale + shift  (BatchNorm folded to one FMA); LeakyReLU(1)=id
# ---------------------------------------------------------------------------
def _bn_act_kernel(conv_ref, scale_ref, shift_ref, y_ref):
    y = conv_ref[...].astype(jnp.float32) * scale_ref[...] + shift_ref[...]
    if NEG_SLOPE != 1.0:            # slope == 1 -> identity, elided at trace time
        y = jnp.where(y >= 0, y, NEG_SLOPE * y)
    y_ref[...] = y.astype(y_ref.dtype)


# ---------------------------------------------------------------------------
# Host-side glue
# ---------------------------------------------------------------------------
def _im2col_bf16_padded(x, kh, kw, pad, stride, ho, wo, mpad, kpad):
    """x: [N, C_in, H, W] -> bf16 [mpad, kpad], feature order (c_in, kh, kw)."""
    n, cin, _, _ = x.shape
    xp = jnp.pad(x.astype(jnp.bfloat16), ((0, 0), (0, 0), (pad, pad), (pad, pad)))
    cols = []
    for i in range(kh):
        for j in range(kw):
            cols.append(xp[:, :, i:i + ho * stride:stride, j:j + wo * stride:stride])
    patches = jnp.stack(cols, axis=2)                        # [N, Cin, KH*KW, Ho, Wo]
    patches = jnp.transpose(patches, (0, 3, 4, 1, 2))        # [N, Ho, Wo, Cin, KH*KW]
    patches = patches.reshape(n * ho * wo, cin * kh * kw)    # bf16 [M, K]
    buf = jnp.zeros((mpad, kpad), jnp.bfloat16)
    return jax.lax.dynamic_update_slice(buf, patches, (0, 0))


def encoder_block_forward(x, conv_w, conv_b, bn_gamma, bn_beta,
                          kernel_size=7, padding=3, stride=4, out=False,
                          y_dtype=jnp.float32):
    """x: [N, C_in, H, W] f32 (NCHW). Returns NCHW output (and conv output if out=True).

    Set y_dtype=jnp.bfloat16 if the consumer tolerates bf16 (halves pass-2 writeback)."""
    n, cin, h, w = x.shape
    cout = conv_w.shape[0]
    kh = kw = kernel_size
    ho = (h + 2 * padding - kh) // stride + 1
    wo = (w + 2 * padding - kw) // stride + 1
    m = n * ho * wo
    k = cin * kh * kw

    kpad = _round_up(k, 128)            # lane granularity is enough (MXU native 128)
    cpad = _round_up(cout, 128)         # lane-dense outputs / full MXU columns

    conv_dtype = jnp.bfloat16           # conv intermediate always bf16 (HBM-bound passes)
    conv_bytes = 2
    y_bytes = jnp.dtype(y_dtype).itemsize

    budget = _vmem_budget_bytes()
    tm = _pick_tile_m(m, kpad, cpad, conv_bytes, y_bytes, budget)
    mpad = _round_up(m, tm)
    n_tiles = mpad // tm

    # bf16 MXU operands written directly into padded buffers (no f32 round trip)
    x_p = _im2col_bf16_padded(x, kh, kw, padding, stride, ho, wo, mpad, kpad)
    wmat = conv_w.reshape(cout, k).T.astype(jnp.bfloat16)    # [K, C_out]
    w_p = jnp.zeros((kpad, cpad), jnp.bfloat16).at[:k, :cout].set(wmat)
    b_p = jnp.zeros((1, cpad), jnp.float32).at[:, :cout].set(conv_b.reshape(1, cout))
    g_p = jnp.zeros((1, cpad), jnp.float32).at[:, :cout].set(bn_gamma.reshape(1, cout))
    be_p = jnp.zeros((1, cpad), jnp.float32).at[:, :cout].set(bn_beta.reshape(1, cout))

    conv_flat, p_sum, p_sumsq = pl.pallas_call(
        _conv_stats_kernel,
        out_shape=(
            jax.ShapeDtypeStruct((mpad, cpad), conv_dtype),
            jax.ShapeDtypeStruct((n_tiles, 1, cpad), jnp.float32),
            jax.ShapeDtypeStruct((n_tiles, 1, cpad), jnp.float32),
        ),
        grid_spec=pltpu.PrefetchScalarGridSpec(
            num_scalar_prefetch=0,
            grid=(n_tiles,),
            in_specs=[
                pl.BlockSpec((tm, kpad), lambda i: (i, 0)),      # X tile
                pl.BlockSpec((kpad, cpad), lambda i: (0, 0)),    # W resident
                pl.BlockSpec((1, cpad), lambda i: (0, 0)),       # bias resident
            ],
            out_specs=(
                pl.BlockSpec((tm, cpad), lambda i: (i, 0)),      # conv tile
                pl.BlockSpec((1, 1, cpad), lambda i: (i, 0, 0)), # per-tile partial sum
                pl.BlockSpec((1, 1, cpad), lambda i: (i, 0, 0)), # per-tile partial sumsq
            ),
        ),
        compiler_params=pltpu.CompilerParams(
            dimension_semantics=("parallel",),                   # megacore-shardable (v7x)
            vmem_limit_bytes=budget,
        ),
    )(x_p, w_p, b_p)

    # Reduce partials + fold BatchNorm into scale/shift once (tiny (1, Cpad) XLA ops).
    # Padded rows of conv equal exactly `bias` (zero X rows), so correct analytically.
    pad_rows = jnp.float32(mpad - m)
    tot_sum = jnp.sum(p_sum, axis=0) - pad_rows * b_p            # (1, Cpad)
    tot_sumsq = jnp.sum(p_sumsq, axis=0) - pad_rows * b_p * b_p  # (1, Cpad)
    inv_m = jnp.float32(1.0 / m)
    mean = tot_sum * inv_m
    var = jnp.maximum(tot_sumsq * inv_m - mean * mean, 0.0)
    scale = g_p * jax.lax.rsqrt(var + EPS)
    shift = be_p - mean * scale

    y_flat = pl.pallas_call(
        _bn_act_kernel,
        out_shape=jax.ShapeDtypeStruct((mpad, cpad), y_dtype),
        grid_spec=pltpu.PrefetchScalarGridSpec(
            num_scalar_prefetch=0,
            grid=(n_tiles,),
            in_specs=[
                pl.BlockSpec((tm, cpad), lambda i: (i, 0)),      # conv tile (bf16)
                pl.BlockSpec((1, cpad), lambda i: (0, 0)),       # scale resident
                pl.BlockSpec((1, cpad), lambda i: (0, 0)),       # shift resident
            ],
            out_specs=pl.BlockSpec((tm, cpad), lambda i: (i, 0)),
        ),
        compiler_params=pltpu.CompilerParams(
            dimension_semantics=("parallel",),
            vmem_limit_bytes=budget,
        ),
    )(conv_flat, scale, shift)

    def to_nchw(flat):
        # conv_flat / y_flat must always be consumed through this slice (padded
        # rows hold `bias`, padded channels are garbage-free zeros).
        core = flat[:m, :cout].astype(jnp.float32).reshape(n, ho, wo, cout)
        return jnp.transpose(core, (0, 3, 1, 2))

    if out:
        return to_nchw(y_flat), to_nchw(conv_flat)
    return to_nchw(y_flat)


# ---------------------------------------------------------------------------
# Pure-JAX reference (bf16 conv operands to match the kernel's MXU precision)
# ---------------------------------------------------------------------------
def _reference(x, conv_w, conv_b, bn_gamma, bn_beta, padding=3, stride=4):
    conv = jax.lax.conv_general_dilated(
        x.astype(jnp.bfloat16), conv_w.astype(jnp.bfloat16),
        window_strides=(stride, stride),
        padding=((padding, padding), (padding, padding)),
        dimension_numbers=("NCHW", "OIHW", "NCHW"),
        preferred_element_type=jnp.float32,
    ) + conv_b.reshape(1, -1, 1, 1)
    mean = jnp.mean(conv, axis=(0, 2, 3), keepdims=True)
    var = jnp.mean((conv - mean) ** 2, axis=(0, 2, 3), keepdims=True)
    y = (conv - mean) * jax.lax.rsqrt(var + EPS)
    y = y * bn_gamma.reshape(1, -1, 1, 1) + bn_beta.reshape(1, -1, 1, 1)
    y = jnp.where(y >= 0, y, NEG_SLOPE * y)
    return y, conv


if __name__ == "__main__":
    key = jax.random.PRNGKey(0)
    k_x, k_w, k_b, k_g, k_be = jax.random.split(key, 5)

    N, C_IN, H, W = 2, 4, 16, 16
    C_OUT, K = 8, 7

    x = jax.random.normal(k_x, (N, C_IN, H, W), dtype=jnp.float32)
    conv_w = jax.random.normal(k_w, (C_OUT, C_IN, K, K), dtype=jnp.float32) * 0.05
    conv_b = jax.random.normal(k_b, (C_OUT,), dtype=jnp.float32) * 0.1
    bn_gamma = 1.0 + 0.1 * jax.random.normal(k_g, (C_OUT,), dtype=jnp.float32)
    bn_beta = 0.1 * jax.random.normal(k_be, (C_OUT,), dtype=jnp.float32)

    y, conv_out = encoder_block_forward(x, conv_w, conv_b, bn_gamma, bn_beta, out=True)
    y = jax.block_until_ready(y)
    conv_out = jax.block_until_ready(conv_out)

    y_ref, conv_ref = _reference(x, conv_w, conv_b, bn_gamma, bn_beta)
    assert y.shape == (N, C_OUT, 4, 4) and conv_out.shape == (N, C_OUT, 4, 4)
    assert jnp.allclose(conv_out, conv_ref, atol=2e-2, rtol=2e-2)
    assert jnp.allclose(y, y_ref, atol=2e-2, rtol=2e-2)

    # Also exercise the out=False path.
    y_only = jax.block_until_ready(
        encoder_block_forward(x, conv_w, conv_b, bn_gamma, bn_beta, out=False))
    assert jnp.allclose(y_only, y_ref, atol=5e-2, rtol=5e-2)

    print("KERNEL_OK")
</pallas_src>

<mosaic_0001>
module attributes {stable_mosaic.version = 11 : i64} {
  func.func @_conv_stats_kernel(%arg0: i32, %arg1: memref<32x256xbf16, #tpu.memory_space<vmem>>, %arg2: memref<256x128xbf16, #tpu.memory_space<vmem>>, %arg3: memref<1x128xf32, #tpu.memory_space<vmem>>, %arg4: memref<32x128xbf16, #tpu.memory_space<vmem>>, %arg5: memref<1x1x128xf32, #tpu.memory_space<vmem>>, %arg6: memref<1x1x128xf32, #tpu.memory_space<vmem>>) attributes {dimension_semantics = [#tpu.dimension_semantics<parallel>], iteration_bounds = array<i64: 1>, scalar_prefetch = 0 : i64, scratch_operands = 0 : i64, tpu.core_type = #tpu.core_type<tc>, window_params = [{transform_indices = @transform_0, window_bounds = array<i64: 32, 256>}, {pipeline_mode = #tpu.pipeline_mode<synchronous>, transform_indices = @transform_1, window_bounds = array<i64: 256, 128>}, {pipeline_mode = #tpu.pipeline_mode<synchronous>, transform_indices = @transform_2, window_bounds = array<i64: 1, 128>}, {transform_indices = @transform_3, window_bounds = array<i64: 32, 128>}, {transform_indices = @transform_4, window_bounds = array<i64: 1, 1, 128>}, {transform_indices = @transform_5, window_bounds = array<i64: 1, 1, 128>}]} {
    %c0 = arith.constant 0 : index
    %c0_0 = arith.constant 0 : index
    %0 = vector.load %arg1[%c0, %c0_0] : memref<32x256xbf16, #tpu.memory_space<vmem>>, vector<32x256xbf16>
    %c0_1 = arith.constant 0 : index
    %c0_2 = arith.constant 0 : index
    %1 = vector.load %arg2[%c0_1, %c0_2] : memref<256x128xbf16, #tpu.memory_space<vmem>>, vector<256x128xbf16>
    %cst = arith.constant dense<0.000000e+00> : vector<32x128xf32>
    %2 = tpu.matmul %0, %1, %cst {dimension_numbers = #tpu.dot_dimension_numbers<[1], [0], [0], [1], [0, 0, 1, 1], [], []>} : vector<32x256xbf16>, vector<256x128xbf16>, vector<32x128xf32> -> vector<32x128xf32>
    %c0_3 = arith.constant 0 : index
    %c0_4 = arith.constant 0 : index
    %3 = vector.load %arg3[%c0_3, %c0_4] : memref<1x128xf32, #tpu.memory_space<vmem>>, vector<1x128xf32>
    %4 = vector.broadcast %3 : vector<1x128xf32> to vector<32x128xf32>
    %5 = arith.addf %2, %4 : vector<32x128xf32>
    %6 = arith.truncf %5 : vector<32x128xf32> to vector<32x128xbf16>
    %c0_5 = arith.constant 0 : index
    %c0_6 = arith.constant 0 : index
    %7 = vector.load %arg4[%c0_5, %c0_6] : memref<32x128xbf16, #tpu.memory_space<vmem>>, vector<32x128xbf16>
    tpu.vector_store %arg4[%c0_5, %c0_6], %6 {strides = array<i32>} : memref<32x128xbf16, #tpu.memory_space<vmem>>, vector<32x128xbf16>,
    %cst_7 = arith.constant dense<0.000000e+00> : vector<128xf32>
    %8 = vector.multi_reduction <add>, %5, %cst_7 [0] : vector<32x128xf32> to vector<128xf32>
    %9 = vector.shape_cast %8 : vector<128xf32> to vector<1x128xf32>
    %10 = arith.mulf %5, %5 : vector<32x128xf32>
    %cst_8 = arith.constant dense<0.000000e+00> : vector<128xf32>
    %11 = vector.multi_reduction <add>, %10, %cst_8 [0] : vector<32x128xf32> to vector<128xf32>
    %12 = vector.shape_cast %11 : vector<128xf32> to vector<1x128xf32>
    %13 = vector.shape_cast %9 : vector<1x128xf32> to vector<1x1x128xf32>
    %c0_9 = arith.constant 0 : index
    %c0_10 = arith.constant 0 : index
    %c0_11 = arith.constant 0 : index
    %14 = vector.load %arg5[%c0_9, %c0_10, %c0_11] : memref<1x1x128xf32, #tpu.memory_space<vmem>>, vector<1x1x128xf32>
    tpu.vector_store %arg5[%c0_9, %c0_10, %c0_11], %13 {strides = array<i32>} : memref<1x1x128xf32, #tpu.memory_space<vmem>>, vector<1x1x128xf32>,
    %15 = vector.shape_cast %12 : vector<1x128xf32> to vector<1x1x128xf32>
    %c0_12 = arith.constant 0 : index
    %c0_13 = arith.constant 0 : index
    %c0_14 = arith.constant 0 : index
    %16 = vector.load %arg6[%c0_12, %c0_13, %c0_14] : memref<1x1x128xf32, #tpu.memory_space<vmem>>, vector<1x1x128xf32>
    tpu.vector_store %arg6[%c0_12, %c0_13, %c0_14], %15 {strides = array<i32>} : memref<1x1x128xf32, #tpu.memory_space<vmem>>, vector<1x1x128xf32>,
    return
  }
  func.func @transform_0(%arg0: i32) -> (i32, i32) {
    %c0_i32 = arith.constant 0 : i32
    %c0_i32_0 = arith.constant 0 : i32
    return %arg0, %c0_i32 : i32, i32
  }
  func.func @transform_1(%arg0: i32) -> (i32, i32) {
    %c0_i32 = arith.constant 0 : i32
    %c0_i32_0 = arith.constant 0 : i32
    %c0_i32_1 = arith.constant 0 : i32
    return %c0_i32, %c0_i32_0 : i32, i32
  }
  func.func @transform_2(%arg0: i32) -> (i32, i32) {
    %c0_i32 = arith.constant 0 : i32
    %c0_i32_0 = arith.constant 0 : i32
    %c0_i32_1 = arith.constant 0 : i32
    return %c0_i32, %c0_i32_0 : i32, i32
  }
  func.func @transform_3(%arg0: i32) -> (i32, i32) {
    %c0_i32 = arith.constant 0 : i32
    %c0_i32_0 = arith.constant 0 : i32
    return %arg0, %c0_i32 : i32, i32
  }
  func.func @transform_4(%arg0: i32) -> (i32, i32, i32) {
    %c0_i32 = arith.constant 0 : i32
    %c0_i32_0 = arith.constant 0 : i32
    %c0_i32_1 = arith.constant 0 : i32
    return %arg0, %c0_i32, %c0_i32_0 : i32, i32, i32
  }
  func.func @transform_5(%arg0: i32) -> (i32, i32, i32) {
    %c0_i32 = arith.constant 0 : i32
    %c0_i32_0 = arith.constant 0 : i32
    %c0_i32_1 = arith.constant 0 : i32
    return %arg0, %c0_i32, %c0_i32_0 : i32, i32, i32
  }
}

</mosaic_0001>

<llo_original>
// kernel: tpu_custom_call.1
$region0: #{tpu_custom_call.1}
  #allocation0 [shape = 'u32[]', space=smem, size = 0x4, offset = 0x4, fixed_abs, tag = 'smem constant byte address 0x4 - core index']
  #allocation1 [shape = 'u32[144,128]{1,0:T(1,128)}', space=vmem, size = 0x12000, scoped, tag = 'internal scratch']
  %s0 = inlined_call_operand.hbm [shape: bf16[32,256], index: 0, kind: input, shape index: {}]
  %s1 = inlined_call_operand.hbm [shape: bf16[256,128], index: 1, kind: input, shape index: {}]
  %s2 = inlined_call_operand.vmem [shape: f32[1,128], index: 2, kind: input, shape index: {}]
  %s3 = inlined_call_operand.hbm [shape: bf16[32,128], index: 3, kind: output, shape index: {0}]
  %s4 = inlined_call_operand.hbm [shape: f32[1,1,128], index: 4, kind: output, shape index: {1}]
  %s5 = inlined_call_operand.hbm [shape: f32[1,1,128], index: 5, kind: output, shape index: {2}]
  %6 = xla_tuple %s3, %s4, %s5
  %s7 = sld [smem:[#allocation0]]
  $region46: #{tpu_custom_call.1} parent=0
    _
  %s9 = ssub.s32 1, %s7
  %s10 = scalar_select 0, %s9, %s7
  $region1: #{tpu_custom_call.1} parent=0
    #allocation2 [shape = 'u8[16384]{0}', space=vmem, size = 0x4000, scoped, tag = 'input window, operand 0, single buffered']
    #allocation3 [shape = 's32[1]{0}', space=sflag, size = 0x4, scoped, tag = 'scoped memory for tpu_custom_call.1']
    #allocation4 [shape = 's32[1]{0}', space=sflag, size = 0x4, scoped, tag = 'scoped memory for tpu_custom_call.1']
    #allocation5 [shape = 'u8[65536]{0}', space=vmem, size = 0x10000, scoped, tag = 'input window, operand 1, single buffered']
    #allocation6 [shape = 's32[1]{0}', space=sflag, size = 0x4, scoped, tag = 'scoped memory for tpu_custom_call.1']
    #allocation7 [shape = 'u8[8192]{0}', space=vmem, size = 0x2000, scoped, tag = 'output window, operand 0, single buffered']
    #allocation8 [shape = 'u8[512]{0}', space=vmem, size = 0x400, scoped, tag = 'output window, operand 1, single buffered']
    #allocation9 [shape = 's32[1]{0}', space=sflag, size = 0x4, scoped, tag = 'scoped memory for tpu_custom_call.1']
    #allocation10 [shape = 'u8[512]{0}', space=vmem, size = 0x400, scoped, tag = 'output window, operand 2, single buffered']
    %11 = vsyncpa [#allocation3], 0
    %12 = vsyncpa [#allocation6], 0
    %13 = vsyncpa [#allocation4], 0
    %14 = vsyncpa [#allocation9], 0
    // Predicated region
    $region2: #{tpu_custom_call.1} parent=1 // pred_check
      _
    $region3: #{tpu_custom_call.1} parent=1 // pred_check_branch
      %16 = sbr.rel (0) target = $region5
    $region4: #{tpu_custom_call.1} parent=1 // pred_region
      %s18 = ssub.s32 512, 512
      %19 = vsyncadd [#allocation3], %s18
      %s20 = sshll.u32 [#allocation2], 4
      %s21 = int_to_ptr.vmem [resolvable:$true] %s20
      %26 = dma.hbm_to_vmem [thread:$0]  %s0, 512, %s21, [#allocation3], 128, 128, 8
    $region5: #{tpu_custom_call.1} parent=1 // pred_fallthru
      _
    // Predicated region
    $region6: #{tpu_custom_call.1} parent=1 // pred_check
      _
    $region7: #{tpu_custom_call.1} parent=1 // pred_check_branch
      %28 = sbr.rel (0) target = $region9
    $region8: #{tpu_custom_call.1} parent=1 // pred_region
      %s30 = ssub.s32 2048, 2048
      %31 = vsyncadd [#allocation6], %s30
      %s32 = sshll.u32 [#allocation5], 4
      %s33 = int_to_ptr.vmem [resolvable:$true] %s32
      %38 = dma.hbm_to_vmem [thread:$0]  %s1, 2048, %s33, [#allocation6], 64, 64, 4
    $region9: #{tpu_custom_call.1} parent=1 // pred_fallthru
      _
    // Predicated region
    $region10: #{tpu_custom_call.1} parent=1 // pred_check
      _
    $region11: #{tpu_custom_call.1} parent=1 // pred_check_branch
      %40 = sbr.rel (0) target = $region13
    $region12: #{tpu_custom_call.1} parent=1 // pred_region
      _
    $region13: #{tpu_custom_call.1} parent=1 // pred_fallthru
      _
    // Predicated region
    $region14: #{tpu_custom_call.1} parent=1 // pred_check
      _
    $region15: #{tpu_custom_call.1} parent=1 // pred_check_branch
      %42 = sbr.rel (0) target = $region17
    $region16: #{tpu_custom_call.1} parent=1 // pred_region
      %43 = dma.done [#allocation3], 512
    $region17: #{tpu_custom_call.1} parent=1 // pred_fallthru
      _
    // Predicated region
    $region18: #{tpu_custom_call.1} parent=1 // pred_check
      _
    $region19: #{tpu_custom_call.1} parent=1 // pred_check_branch
      %45 = sbr.rel (0) target = $region21
    $region20: #{tpu_custom_call.1} parent=1 // pred_region
      %46 = dma.done [#allocation6], 2048
    $region21: #{tpu_custom_call.1} parent=1 // pred_fallthru
      _
    %v48 = vld [vmem:[#allocation2] sm:$0xff]
    %v49 = vld [vmem:[#allocation2 + $0x8] sm:$0xff]
    %v50 = vld [vmem:[#allocation2 + $0x10] sm:$0xff]
    %v51 = vld [vmem:[#allocation2 + $0x18] sm:$0xff]
    %v52 = vld [vmem:[#allocation5] sm:$0xf]
    %v53 = vld [vmem:[#allocation5 + $0x4] sm:$0xf]
    %v54 = vld [vmem:[#allocation5 + $0x8] sm:$0xf]
    %v55 = vld [vmem:[#allocation5 + $0xc] sm:$0xf]
    %v56 = vld [vmem:[#allocation5 + $0x10] sm:$0xf]
    %v57 = vld [vmem:[#allocation5 + $0x14] sm:$0xf]
    %v58 = vld [vmem:[#allocation5 + $0x18] sm:$0xf]
    %v59 = vld [vmem:[#allocation5 + $0x1c] sm:$0xf]
    %v60 = vld [vmem:[#allocation5 + $0x20] sm:$0xf]
    %v61 = vld [vmem:[#allocation5 + $0x24] sm:$0xf]
    %v62 = vld [vmem:[#allocation5 + $0x28] sm:$0xf]
    %v63 = vld [vmem:[#allocation5 + $0x2c] sm:$0xf]
    %v64 = vld [vmem:[#allocation5 + $0x30] sm:$0xf]
    %v65 = vld [vmem:[#allocation5 + $0x34] sm:$0xf]
    %v66 = vld [vmem:[#allocation5 + $0x38] sm:$0xf]
    %v67 = vld [vmem:[#allocation5 + $0x3c] sm:$0xf]
    %v68 = vld [vmem:[#allocation5 + $0x40] sm:$0xf]
    %v69 = vld [vmem:[#allocation5 + $0x44] sm:$0xf]
    %v70 = vld [vmem:[#allocation5 + $0x48] sm:$0xf]
    %v71 = vld [vmem:[#allocation5 + $0x4c] sm:$0xf]
    %v72 = vld [vmem:[#allocation5 + $0x50] sm:$0xf]
    %v73 = vld [vmem:[#allocation5 + $0x54] sm:$0xf]
    %v74 = vld [vmem:[#allocation5 + $0x58] sm:$0xf]
    %v75 = vld [vmem:[#allocation5 + $0x5c] sm:$0xf]
    %v76 = vld [vmem:[#allocation5 + $0x60] sm:$0xf]
    %v77 = vld [vmem:[#allocation5 + $0x64] sm:$0xf]
    %v78 = vld [vmem:[#allocation5 + $0x68] sm:$0xf]
    %v79 = vld [vmem:[#allocation5 + $0x6c] sm:$0xf]
    %v80 = vld [vmem:[#allocation5 + $0x70] sm:$0xf]
    %v81 = vld [vmem:[#allocation5 + $0x74] sm:$0xf]
    %v82 = vld [vmem:[#allocation5 + $0x78] sm:$0xf]
    %v83 = vld [vmem:[#allocation5 + $0x7c] sm:$0xf]
    %v84 = vld [vmem:[%s2] sm:$0x1]
    %v86 = vlaneseq
    %v87 = vshrl.u32 %v86, 7
    %v88 = vsub.s32 0, %v87
    %v89 = vrot.slane %v84, %v88
    %v95 = vunpack.c.l.b16 %v48
    %v96 = vunpack.c.h.b16 %v48
    %v97 = vunpack.c.l.b16 %v49
    %v98 = vunpack.c.h.b16 %v49
    %v99 = vunpack.c.l.b16 %v50
    %v100 = vunpack.c.h.b16 %v50
    %v101 = vunpack.c.l.b16 %v51
    %v102 = vunpack.c.h.b16 %v51
    %v103 = vpack.c.b16 %v97, %v95
    %v104 = vpack.c.b16 %v98, %v96
    %v105 = vpack.c.b16 %v101, %v99
    %v106 = vpack.c.b16 %v102, %v100
    %v143 = vunpack.c.l.b16 %v52
    %v144 = vunpack.c.l.b16 %v53
    %v145 = vunpack.c.l.b16 %v54
    %v146 = vunpack.c.l.b16 %v55
    %v147 = vunpack.c.l.b16 %v56
    %v148 = vunpack.c.l.b16 %v57
    %v149 = vunpack.c.l.b16 %v58
    %v150 = vunpack.c.l.b16 %v59
    %v151 = vunpack.c.l.b16 %v60
    %v152 = vunpack.c.l.b16 %v61
    %v153 = vunpack.c.l.b16 %v62
    %v154 = vunpack.c.l.b16 %v63
    %v155 = vunpack.c.l.b16 %v64
    %v156 = vunpack.c.l.b16 %v65
    %v157 = vunpack.c.l.b16 %v66
    %v158 = vunpack.c.l.b16 %v67
    %v159 = vunpack.c.l.b16 %v68
    %v160 = vunpack.c.l.b16 %v69
    %v161 = vunpack.c.l.b16 %v70
    %v162 = vunpack.c.l.b16 %v71
    %v163 = vunpack.c.l.b16 %v72
    %v164 = vunpack.c.l.b16 %v73
    %v165 = vunpack.c.l.b16 %v74
    %v166 = vunpack.c.l.b16 %v75
    %v167 = vunpack.c.l.b16 %v76
    %v168 = vunpack.c.l.b16 %v77
    %v169 = vunpack.c.l.b16 %v78
    %v170 = vunpack.c.l.b16 %v79
    %v171 = vunpack.c.l.b16 %v80
    %v172 = vunpack.c.l.b16 %v81
    %v173 = vunpack.c.l.b16 %v82
    %v174 = vunpack.c.l.b16 %v83
    %v175 = vpack.c.b16 %v144, %v143
    %v176 = vpack.c.b16 %v146, %v145
    %v177 = vpack.c.b16 %v148, %v147
    %v178 = vpack.c.b16 %v150, %v149
    %v179 = vpack.c.b16 %v152, %v151
    %v180 = vpack.c.b16 %v154, %v153
    %v181 = vpack.c.b16 %v156, %v155
    %v182 = vpack.c.b16 %v158, %v157
    %v183 = vpack.c.b16 %v160, %v159
    %v184 = vpack.c.b16 %v162, %v161
    %v185 = vpack.c.b16 %v164, %v163
    %v186 = vpack.c.b16 %v166, %v165
    %v187 = vpack.c.b16 %v168, %v167
    %v188 = vpack.c.b16 %v170, %v169
    %v189 = vpack.c.b16 %v172, %v171
    %v190 = vpack.c.b16 %v174, %v173
    %207 = vmatprep.subr.bf16.mxu0 0
    %208 = vmatpush1.bf16.msra.mxu0 %v175
    %209 = vmatprep.subr.bf16.mxu0 0
    %210 = vmatpush1.bf16.msra.mxu0 %v176
    %211 = vmatprep.subr.bf16.mxu0 0
    %212 = vmatpush1.bf16.msra.mxu0 %v177
    %213 = vmatprep.subr.bf16.mxu0 0
    %214 = vmatpush1.bf16.msra.mxu0 %v178
    %215 = vmatprep.subr.bf16.mxu0 0
    %216 = vmatpush1.bf16.msra.mxu0 %v179
    %217 = vmatprep.subr.bf16.mxu0 0
    %218 = vmatpush1.bf16.msra.mxu0 %v180
    %219 = vmatprep.subr.bf16.mxu0 0
    %220 = vmatpush1.bf16.msra.mxu0 %v181
    %221 = vmatprep.subr.bf16.mxu0 0
    %222 = vmatpush1.bf16.msra.mxu0 %v182
    %223 = vmatprep.subr.bf16.mxu0 0
    %224 = vmatpush1.bf16.msra.mxu0 %v183
    %225 = vmatprep.subr.bf16.mxu0 0
    %226 = vmatpush1.bf16.msra.mxu0 %v184
    %227 = vmatprep.subr.bf16.mxu0 0
    %228 = vmatpush1.bf16.msra.mxu0 %v185
    %229 = vmatprep.subr.bf16.mxu0 0
    %230 = vmatpush1.bf16.msra.mxu0 %v186
    %231 = vmatprep.subr.bf16.mxu0 0
    %232 = vmatpush1.bf16.msra.mxu0 %v187
    %233 = vmatprep.subr.bf16.mxu0 0
    %234 = vmatpush1.bf16.msra.mxu0 %v188
    %235 = vmatprep.subr.bf16.mxu0 0
    %236 = vmatpush1.bf16.msra.mxu0 %v189
    %237 = vmatprep.subr.bf16.mxu0 0
    %238 = vmatpush1.bf16.msra.mxu0 %v190
    %239 = vmatprep.mubr.bf16.mxu0 %v104
    %240 = vmatmul.mubr.bf16.gmra.mrb[0].mxu0 %v103
    %v241 = vpop.f32.mrb[0].mxu0
    %v242 = vadd.f32 %v89, %v241
    %v243 = vpop.f32.mrb[0].mxu0
    %v244 = vpop.f32.mrb[0].mxu0
    %v245 = vadd.f32 %v89, %v244
    %v246 = vpop.f32.mrb[0].mxu0
    %247 = vmatprep.mubr.bf16.mxu0 %v106
    %248 = vmatmul.mubr.bf16.gmra.mrb[0].mxu0 %v105
    %v249 = vpop.f32.mrb[0].mxu0
    %v250 = vadd.f32 %v89, %v249
    %v251 = vpop.f32.mrb[0].mxu0
    %v252 = vpop.f32.mrb[0].mxu0
    %v253 = vadd.f32 %v89, %v252
    %v254 = vpop.f32.mrb[0].mxu0
    %255 = vdwg.mxu0
    %v256 = vpack.c.bf16 %v245, %v242
    %v257 = vpack.c.bf16 %v253, %v250
    %v260 = vunpack.c.l.b16 %v256
    %v261 = vunpack.c.h.b16 %v256
    %v262 = vunpack.c.l.b16 %v257
    %v263 = vunpack.c.h.b16 %v257
    %v264 = vpack.c.b16 %v260, %v260
    %v265 = vpack.c.b16 %v261, %v261
    %v266 = vpack.c.b16 %v262, %v262
    %v267 = vpack.c.b16 %v263, %v263
    %272 = vst [vmem:[#allocation7] sm:$0xf] %v264
    %273 = vst [vmem:[#allocation7 + $0x4] sm:$0xf] %v265
    %274 = vst [vmem:[#allocation7 + $0x8] sm:$0xf] %v266
    %275 = vst [vmem:[#allocation7 + $0xc] sm:$0xf] %v267
    %v276 = vadd.f32 %v242, %v245
    %v277 = vadd.f32 %v276, %v250
    %v278 = vadd.f32 %v277, %v253
    %v279 = vrot.slane %v278, 4
    %v280 = vadd.f32 %v278, %v279
    %v281 = vrot.slane %v280, 2
    %v282 = vadd.f32 %v280, %v281
    %v283 = vrot.slane %v282, 1
    %v284 = vadd.f32 %v282, %v283
    %v285 = vmul.f32 %v242, %v242
    %v286 = vmul.f32 %v245, %v245
    %v287 = vmul.f32 %v250, %v250
    %v288 = vmul.f32 %v253, %v253
    %v289 = vadd.f32 %v285, %v286
    %v290 = vadd.f32 %v289, %v287
    %v291 = vadd.f32 %v290, %v288
    %v292 = vrot.slane %v291, 4
    %v293 = vadd.f32 %v291, %v292
    %v294 = vrot.slane %v293, 2
    %v295 = vadd.f32 %v293, %v294
    %v296 = vrot.slane %v295, 1
    %v297 = vadd.f32 %v295, %v296
    %298 = vst [vmem:[#allocation8] sm:$0x1] %v284
    %299 = vst [vmem:[#allocation10] sm:$0x1] %v297
    // Predicated region
    $region22: #{tpu_custom_call.1} parent=1 // pred_check
      _
    $region23: #{tpu_custom_call.1} parent=1 // pred_check_branch
      %301 = sbr.rel (0) target = $region25
    $region24: #{tpu_custom_call.1} parent=1 // pred_region
      %s303 = ssub.s32 256, 256
      %304 = vsyncadd [#allocation4], %s303
      %s305 = sshll.u32 [#allocation7], 4
      %s306 = int_to_ptr.vmem [resolvable:$true] %s305
      %311 = dma.vmem_to_hbm [thread:$0]  %s306, 256, %s3, [#allocation4], 64, 64, 4
    $region25: #{tpu_custom_call.1} parent=1 // pred_fallthru
      _
    // Predicated region
    $region26: #{tpu_custom_call.1} parent=1 // pred_check
      _
    $region27: #{tpu_custom_call.1} parent=1 // pred_check_branch
      %313 = sbr.rel (0) target = $region29
    $region28: #{tpu_custom_call.1} parent=1 // pred_region
      %s315 = ssub.s32 16, 16
      %316 = vsyncadd [#allocation9], %s315
      %s318 = sshll.u32 [#allocation8], 4
      %s319 = int_to_ptr.vmem [resolvable:$true] %s318
      %321 = dma.vmem_to_hbm [thread:$0]  %s319, 16, %s4, [#allocation9]
    $region29: #{tpu_custom_call.1} parent=1 // pred_fallthru
      _
    // Predicated region
    $region30: #{tpu_custom_call.1} parent=1 // pred_check
      _
    $region31: #{tpu_custom_call.1} parent=1 // pred_check_branch
      %323 = sbr.rel (0) target = $region33
    $region32: #{tpu_custom_call.1} parent=1 // pred_region
      %s325 = ssub.s32 16, 16
      %326 = vsyncadd [#allocation9], %s325
      %s328 = sshll.u32 [#allocation10], 4
      %s329 = int_to_ptr.vmem [resolvable:$true] %s328
      %331 = dma.vmem_to_hbm [thread:$0]  %s329, 16, %s5, [#allocation9]
    $region33: #{tpu_custom_call.1} parent=1 // pred_fallthru
      _
    // Predicated region
    $region34: #{tpu_custom_call.1} parent=1 // pred_check
      _
    $region35: #{tpu_custom_call.1} parent=1 // pred_check_branch
      %333 = sbr.rel (0) target = $region37
    $region36: #{tpu_custom_call.1} parent=1 // pred_region
      %334 = dma.done [#allocation4], 256
    $region37: #{tpu_custom_call.1} parent=1 // pred_fallthru
      _
    // Predicated region
    $region38: #{tpu_custom_call.1} parent=1 // pred_check
      _
    $region39: #{tpu_custom_call.1} parent=1 // pred_check_branch
      %336 = sbr.rel (0) target = $region41
    $region40: #{tpu_custom_call.1} parent=1 // pred_region
      %337 = dma.done [#allocation9], 16
    $region41: #{tpu_custom_call.1} parent=1 // pred_fallthru
      _
    // Predicated region
    $region42: #{tpu_custom_call.1} parent=1 // pred_check
      _
    $region43: #{tpu_custom_call.1} parent=1 // pred_check_branch
      %339 = sbr.rel (0) target = $region45
    $region44: #{tpu_custom_call.1} parent=1 // pred_region
      %340 = dma.done [#allocation9], 16
    $region45: #{tpu_custom_call.1} parent=1 // pred_fallthru
      _
    %341 = vsyncpa [#allocation3], 1
    %342 = vsyncpa [#allocation6], 1
    %343 = vsyncpa [#allocation4], 1
    %344 = vsyncpa [#allocation9], 1

</llo_original>
